<compile_context>
chip_gen: v7x
topology: tpu7x:2x2x1
jax: 0.10.0
libtpu: 0.0.40
codegen_flags: <defaults>
</compile_context>

<pallas_src>
import math

import jax
import jax.numpy as jnp
from jax.experimental import pallas as pl
from jax.experimental.pallas import tpu as pltpu


def _conv_bias_lrelu_kernel(w_ref, p_ref, b_ref, o_ref):
    # w_ref: (Cout, K)   pre-scaled flattened weight, K = kh*kw*Cin (resident)
    # p_ref: (K, TM)     im2col patch tile, flattened N*H*W on the lane axis
    # b_ref: (Cout, 1)   pre-scaled bias column (lane-broadcast in epilogue)
    # o_ref: (Cout, TM)  lane-dense output tile
    acc = jnp.dot(w_ref[...], p_ref[...], preferred_element_type=jnp.float32)
    y = acc + b_ref[...].astype(jnp.float32)          # broadcast along lanes
    # bias_act 'lrelu': leaky_relu(slope=0.2) then def_gain = sqrt(2)
    y = jnp.where(y >= 0.0, y, 0.2 * y) * jnp.float32(math.sqrt(2.0))
    o_ref[...] = y.astype(o_ref.dtype)


def _pick_tile_m(m, max_tile=2048):
    """Largest multiple of 128 that divides m and is <= max_tile (fallback m)."""
    best = None
    t = 128
    while t <= min(m, max_tile):
        if m % t == 0:
            best = t
        t += 128
    return best if best is not None else m


def conv2d_layer_forward(x_nchw, weight_oihw, bias, *, lr_multiplier=1.0,
                         operand_dtype=jnp.float32):
    """Conv2dLayer.forward (use_w=False, up=down=1, act='lrelu', no noise/norm/clamp).

    operand_dtype: dtype of the MXU operands (use jnp.bfloat16 for real
    StyleGAN2 channel counts on v6e/v7x; accumulation stays f32 either way).
    """
    N, Cin, H, W = x_nchw.shape
    Cout, Cin_w, kh, kw = weight_oihw.shape
    assert Cin == Cin_w
    assert kh == kw and kh % 2 == 1, "symmetric padding assumes square, odd kernel"
    pad = kh // 2
    K = kh * kw * Cin                      # contraction depth
    M = N * H * W                          # lane-dense output axis

    weight_gain = lr_multiplier / math.sqrt(Cin * kh * kw)
    bias_gain = lr_multiplier

    # ---- plain-JAX layout plumbing (zero FLOPs besides the gain scaling) ----
    # Weight: (Cout, Cin, kh, kw) -> (Cout, kh, kw, Cin) -> (Cout, K), pre-scaled.
    w_flat = (weight_oihw.astype(jnp.float32) * weight_gain)
    w_flat = jnp.transpose(w_flat, (0, 2, 3, 1)).reshape(Cout, K)
    w_flat = w_flat.astype(operand_dtype)
    # Bias column (Cout, 1), pre-scaled; kept f32 (epilogue runs in f32).
    b_col = (bias.astype(jnp.float32) * bias_gain).reshape(Cout, 1)

    # Zero padding + im2col: patches[K, M], contraction index order (i, j, c),
    # lane index order (n, h, w) — matches w_flat above.
    xp = jnp.pad(x_nchw.astype(jnp.float32),
                 ((0, 0), (0, 0), (pad, pad), (pad, pad)))
    taps = []
    for i in range(kh):
        for j in range(kw):
            taps.append(jax.lax.slice(xp, (0, 0, i, j), (N, Cin, i + H, j + W)))
    patches = jnp.stack(taps, axis=0)                    # (T, N, Cin, H, W)
    patches = jnp.transpose(patches, (0, 2, 1, 3, 4))    # (T, Cin, N, H, W)
    patches = patches.reshape(K, M).astype(operand_dtype)
    # TODO(synk): for large StyleGAN2 resolutions, replace the HBM-materialized
    # im2col (9x input bytes) with in-kernel row tiles + kh-1 halo DMAs.

    tile_m = _pick_tile_m(M)
    grid = (M // tile_m,)

    out_flat = pl.pallas_call(
        _conv_bias_lrelu_kernel,
        out_shape=jax.ShapeDtypeStruct((Cout, M), x_nchw.dtype),
        grid_spec=pltpu.PrefetchScalarGridSpec(
            num_scalar_prefetch=0,
            grid=grid,
            in_specs=[
                pl.BlockSpec((Cout, K), lambda m: (0, 0)),       # resident weight
                pl.BlockSpec((K, tile_m), lambda m: (0, m)),     # patch tile
                pl.BlockSpec((Cout, 1), lambda m: (0, 0)),       # resident bias
            ],
            out_specs=pl.BlockSpec((Cout, tile_m), lambda m: (0, m)),
        ),
        compiler_params=pltpu.CompilerParams(
            dimension_semantics=("parallel",)),                  # megacore on v7x
    )(w_flat, patches, b_col)

    # (Cout, N*H*W) -> (N, Cout, H, W)
    out = out_flat.reshape(Cout, N, H, W)
    return jnp.transpose(out, (1, 0, 2, 3))


def _reference(x_nchw, weight_oihw, bias, lr_multiplier=1.0):
    Cout, Cin, kh, kw = weight_oihw.shape
    pad = kh // 2
    wg = lr_multiplier / math.sqrt(Cin * kh * kw)
    y = jax.lax.conv_general_dilated(
        x_nchw, weight_oihw * wg, window_strides=(1, 1),
        padding=((pad, pad), (pad, pad)),
        dimension_numbers=("NCHW", "OIHW", "NCHW"))
    y = y + (bias * lr_multiplier).reshape(1, -1, 1, 1)
    return jnp.where(y >= 0.0, y, 0.2 * y) * math.sqrt(2.0)


if __name__ == "__main__":
    # Module config: in_channels=4, out_channels=8, kernel_size=3,
    # resolution=[16,16], use_w=False, up=down=1, bias=True, lr_multiplier=1.
    N, Cin, Cout, H, W, K = 2, 4, 8, 16, 16, 3

    key = jax.random.PRNGKey(0)
    kx, kw_ = jax.random.split(key)
    x = jax.random.normal(kx, (N, Cin, H, W), dtype=jnp.float32)
    weight = jax.random.normal(kw_, (Cout, Cin, K, K), dtype=jnp.float32)  # torch.randn init
    bias = jnp.zeros((Cout,), dtype=jnp.float32)                           # torch.zeros init
    # TODO(synk): use_noise / use_w / InstanceNorm / conv_clamp branches are
    # off in the default config and not implemented in the kernel.

    out = conv2d_layer_forward(x, weight, bias)
    out = jax.block_until_ready(out)

    ref = _reference(x, weight, bias)
    assert out.shape == (N, Cout, H, W)
    assert jnp.allclose(out, ref, atol=1e-4, rtol=1e-4), "mismatch vs reference"

    print("KERNEL_OK")
</pallas_src>

<mosaic_0001>
module attributes {stable_mosaic.version = 11 : i64} {
  func.func @_conv_bias_lrelu_kernel(%arg0: i32, %arg1: memref<8x36xf32, #tpu.memory_space<vmem>>, %arg2: memref<36x512xf32, #tpu.memory_space<vmem>>, %arg3: memref<8x1xf32, #tpu.memory_space<vmem>>, %arg4: memref<8x512xf32, #tpu.memory_space<vmem>>) attributes {dimension_semantics = [#tpu.dimension_semantics<parallel>], iteration_bounds = array<i64: 1>, scalar_prefetch = 0 : i64, scratch_operands = 0 : i64, tpu.core_type = #tpu.core_type<tc>, window_params = [{pipeline_mode = #tpu.pipeline_mode<synchronous>, transform_indices = @transform_0, window_bounds = array<i64: 8, 36>}, {transform_indices = @transform_1, window_bounds = array<i64: 36, 512>}, {pipeline_mode = #tpu.pipeline_mode<synchronous>, transform_indices = @transform_2, window_bounds = array<i64: 8, 1>}, {transform_indices = @transform_3, window_bounds = array<i64: 8, 512>}]} {
    %c0 = arith.constant 0 : index
    %c0_0 = arith.constant 0 : index
    %0 = vector.load %arg1[%c0, %c0_0] : memref<8x36xf32, #tpu.memory_space<vmem>>, vector<8x36xf32>
    %c0_1 = arith.constant 0 : index
    %c0_2 = arith.constant 0 : index
    %1 = vector.load %arg2[%c0_1, %c0_2] : memref<36x512xf32, #tpu.memory_space<vmem>>, vector<36x512xf32>
    %cst = arith.constant dense<0.000000e+00> : vector<8x512xf32>
    %2 = tpu.matmul %0, %1, %cst {dimension_numbers = #tpu.dot_dimension_numbers<[1], [0], [0], [1], [0, 0, 1, 1], [], []>} : vector<8x36xf32>, vector<36x512xf32>, vector<8x512xf32> -> vector<8x512xf32>
    %c0_3 = arith.constant 0 : index
    %c0_4 = arith.constant 0 : index
    %3 = vector.load %arg3[%c0_3, %c0_4] : memref<8x1xf32, #tpu.memory_space<vmem>>, vector<8x1xf32>
    %4 = vector.broadcast %3 : vector<8x1xf32> to vector<8x512xf32>
    %5 = arith.addf %2, %4 : vector<8x512xf32>
    %cst_5 = arith.constant 0.000000e+00 : f32
    %6 = vector.broadcast %cst_5 : f32 to vector<8x512xf32>
    %7 = arith.cmpf oge, %5, %6 : vector<8x512xf32>
    %cst_6 = arith.constant 2.000000e-01 : f32
    %8 = vector.broadcast %cst_6 : f32 to vector<8x512xf32>
    %9 = arith.mulf %8, %5 : vector<8x512xf32>
    %10 = arith.select %7, %5, %9 : vector<8x512xi1>, vector<8x512xf32>
    %cst_7 = arith.constant 1.41421354 : f32
    %11 = vector.broadcast %cst_7 : f32 to vector<8x512xf32>
    %12 = arith.mulf %10, %11 : vector<8x512xf32>
    %c0_8 = arith.constant 0 : index
    %c0_9 = arith.constant 0 : index
    %13 = vector.load %arg4[%c0_8, %c0_9] : memref<8x512xf32, #tpu.memory_space<vmem>>, vector<8x512xf32>
    tpu.vector_store %arg4[%c0_8, %c0_9], %12 {strides = array<i32>} : memref<8x512xf32, #tpu.memory_space<vmem>>, vector<8x512xf32>,
    return
  }
  func.func @transform_0(%arg0: i32) -> (i32, i32) {
    %c0_i32 = arith.constant 0 : i32
    %c0_i32_0 = arith.constant 0 : i32
    %c0_i32_1 = arith.constant 0 : i32
    return %c0_i32, %c0_i32_0 : i32, i32
  }
  func.func @transform_1(%arg0: i32) -> (i32, i32) {
    %c0_i32 = arith.constant 0 : i32
    %c0_i32_0 = arith.constant 0 : i32
    return %c0_i32, %arg0 : i32, i32
  }
  func.func @transform_2(%arg0: i32) -> (i32, i32) {
    %c0_i32 = arith.constant 0 : i32
    %c0_i32_0 = arith.constant 0 : i32
    %c0_i32_1 = arith.constant 0 : i32
    return %c0_i32, %c0_i32_0 : i32, i32
  }
  func.func @transform_3(%arg0: i32) -> (i32, i32) {
    %c0_i32 = arith.constant 0 : i32
    %c0_i32_0 = arith.constant 0 : i32
    return %c0_i32, %arg0 : i32, i32
  }
}

</mosaic_0001>

<llo_original>
// kernel: tpu_custom_call.1
$region0: #{tpu_custom_call.1}
  #allocation0 [shape = 'u32[]', space=smem, size = 0x4, offset = 0x4, fixed_abs, tag = 'smem constant byte address 0x4 - core index']
  #allocation1 [shape = 'u32[144,128]{1,0:T(1,128)}', space=vmem, size = 0x12000, scoped, tag = 'internal scratch']
  %s0 = inlined_call_operand.vmem [shape: f32[8,36], index: 0, kind: input, shape index: {}]
  %s1 = inlined_call_operand.hbm [shape: f32[36,512], index: 1, kind: input, shape index: {}]
  %s2 = inlined_call_operand.vmem [shape: f32[8,1], index: 2, kind: input, shape index: {}]
  %s3 = inlined_call_operand.hbm [shape: f32[8,512], index: 3, kind: output, shape index: {}]
  %s4 = sld [smem:[#allocation0]]
  $region26: #{tpu_custom_call.1} parent=0
    _
  %s6 = ssub.s32 1, %s4
  %s7 = scalar_select 0, %s6, %s4
  $region1: #{tpu_custom_call.1} parent=0
    #allocation2 [shape = 'u8[81920]{0}', space=vmem, size = 0x14000, scoped, tag = 'input window, operand 1, single buffered']
    #allocation3 [shape = 's32[1]{0}', space=sflag, size = 0x4, scoped, tag = 'scoped memory for tpu_custom_call.1']
    #allocation4 [shape = 's32[1]{0}', space=sflag, size = 0x4, scoped, tag = 'scoped memory for tpu_custom_call.1']
    #allocation5 [shape = 'u8[16384]{0}', space=vmem, size = 0x4000, scoped, tag = 'output window, operand 0, single buffered']
    %8 = vsyncpa [#allocation3], 0
    %9 = vsyncpa [#allocation4], 0
    // Predicated region
    $region2: #{tpu_custom_call.1} parent=1 // pred_check
      _
    $region3: #{tpu_custom_call.1} parent=1 // pred_check_branch
      %11 = sbr.rel (0) target = $region5
    $region4: #{tpu_custom_call.1} parent=1 // pred_region
      _
    $region5: #{tpu_custom_call.1} parent=1 // pred_fallthru
      _
    // Predicated region
    $region6: #{tpu_custom_call.1} parent=1 // pred_check
      _
    $region7: #{tpu_custom_call.1} parent=1 // pred_check_branch
      %13 = sbr.rel (0) target = $region9
    $region8: #{tpu_custom_call.1} parent=1 // pred_region
      %s15 = ssub.s32 2560, 2560
      %16 = vsyncadd [#allocation3], %s15
      %s17 = sshll.u32 [#allocation2], 4
      %s18 = int_to_ptr.vmem [resolvable:$true] %s17
      %23 = dma.hbm_to_vmem [thread:$0]  %s1, 2560, %s18, [#allocation3], 512, 512, 32
    $region9: #{tpu_custom_call.1} parent=1 // pred_fallthru
      _
    // Predicated region
    $region10: #{tpu_custom_call.1} parent=1 // pred_check
      _
    $region11: #{tpu_custom_call.1} parent=1 // pred_check_branch
      %25 = sbr.rel (0) target = $region13
    $region12: #{tpu_custom_call.1} parent=1 // pred_region
      _
    $region13: #{tpu_custom_call.1} parent=1 // pred_fallthru
      _
    // Predicated region
    $region14: #{tpu_custom_call.1} parent=1 // pred_check
      _
    $region15: #{tpu_custom_call.1} parent=1 // pred_check_branch
      %27 = sbr.rel (0) target = $region17
    $region16: #{tpu_custom_call.1} parent=1 // pred_region
      %28 = dma.done [#allocation3], 2560
    $region17: #{tpu_custom_call.1} parent=1 // pred_fallthru
      _
    %v29 = vld [vmem:[%s0] sm:$0xff]
    %v30 = vld [vmem:[#allocation2] sm:$0xff]
    %v31 = vld [vmem:[#allocation2 + $0x8] sm:$0xff]
    %v32 = vld [vmem:[#allocation2 + $0x10] sm:$0xff]
    %v33 = vld [vmem:[#allocation2 + $0x18] sm:$0xff]
    %v34 = vld [vmem:[#allocation2 + $0x20] sm:$0xff]
    %v35 = vld [vmem:[#allocation2 + $0x28] sm:$0xff]
    %v36 = vld [vmem:[#allocation2 + $0x30] sm:$0xff]
    %v37 = vld [vmem:[#allocation2 + $0x38] sm:$0xff]
    %v38 = vld [vmem:[#allocation2 + $0x40] sm:$0xff]
    %v39 = vld [vmem:[#allocation2 + $0x48] sm:$0xff]
    %v40 = vld [vmem:[#allocation2 + $0x50] sm:$0xff]
    %v41 = vld [vmem:[#allocation2 + $0x58] sm:$0xff]
    %v42 = vld [vmem:[#allocation2 + $0x60] sm:$0xff]
    %v43 = vld [vmem:[#allocation2 + $0x68] sm:$0xff]
    %v44 = vld [vmem:[#allocation2 + $0x70] sm:$0xff]
    %v45 = vld [vmem:[#allocation2 + $0x78] sm:$0xff]
    %v46 = vld [vmem:[#allocation2 + $0x80] sm:$0xf]
    %v47 = vld [vmem:[#allocation2 + $0x88] sm:$0xf]
    %v48 = vld [vmem:[#allocation2 + $0x90] sm:$0xf]
    %v49 = vld [vmem:[#allocation2 + $0x98] sm:$0xf]
    %v50 = vld [vmem:[%s2] sm:$0xff]
    %52 = vset.pattern.permute.xlu0 0
    %53 = vperm.xlu0 %52, %v50
    %v54 = vpop.permute.xlu0 %53
    %vm56 = vcmask 293888
    %v58 = vsel %vm56, %v29, 0
    %vm60 = vcmask 1043456
    %v62 = vsel %vm60, %v46, 0
    %v65 = vsel %vm60, %v47, 0
    %v68 = vsel %vm60, %v48, 0
    %v71 = vsel %vm60, %v49, 0
    %73 = vmatprep.subr.mxu0 %v31
    %74 = vmatpush1.msra.mxu0 %v30
    %75 = vmatprep.subr.mxu0 %v35
    %76 = vmatpush1.msra.mxu0 %v34
    %77 = vmatprep.subr.mxu0 %v39
    %78 = vmatpush1.msra.mxu0 %v38
    %79 = vmatprep.subr.mxu0 %v43
    %80 = vmatpush1.msra.mxu0 %v42
    %81 = vmatprep.subr.mxu0 %v65
    %82 = vmatpush1.msra.mxu0 %v62
    %83 = vmatprep.subr.mxu0 0.0
    %84 = vmatpush1.msra.mxu0 0.0
    %85 = vmatprep.subr.mxu0 0.0
    %86 = vmatpush1.msra.mxu0 0.0
    %87 = vmatprep.subr.mxu0 0.0
    %88 = vmatpush1.msra.mxu0 0.0
    %89 = vmatprep.subr.mxu0 0.0
    %90 = vmatpush1.msra.mxu0 0.0
    %91 = vmatprep.subr.mxu0 0.0
    %92 = vmatpush1.msra.mxu0 0.0
    %93 = vmatprep.subr.mxu0 0.0
    %94 = vmatpush1.msra.mxu0 0.0
    %95 = vmatprep.subr.mxu0 0.0
    %96 = vmatpush1.msra.mxu0 0.0
    %97 = vmatprep.subr.mxu0 0.0
    %98 = vmatpush1.msra.mxu0 0.0
    %99 = vmatprep.subr.mxu0 0.0
    %100 = vmatpush1.msra.mxu0 0.0
    %101 = vmatprep.subr.mxu0 0.0
    %102 = vmatpush1.msra.mxu0 0.0
    %103 = vmatprep.subr.mxu0 0.0
    %104 = vmatpush1.msra.mxu0 0.0
    %105 = vmatprep.subr.mxu0 0.0
    %106 = vmatpush1.msra.mxu0 0.0
    %107 = vmatprep.subr.mxu0 0.0
    %108 = vmatpush1.msra.mxu0 0.0
    %109 = vmatprep.subr.mxu0 0.0
    %110 = vmatpush1.msra.mxu0 0.0
    %111 = vmatprep.subr.mxu0 0.0
    %112 = vmatpush1.msra.mxu0 0.0
    %113 = vmatprep.subr.mxu0 0.0
    %114 = vmatpush1.msra.mxu0 0.0
    %115 = vmatprep.subr.mxu0 0.0
    %116 = vmatpush1.msra.mxu0 0.0
    %117 = vmatprep.subr.mxu0 0.0
    %118 = vmatpush1.msra.mxu0 0.0
    %119 = vmatprep.subr.mxu0 0.0
    %120 = vmatpush1.msra.mxu0 0.0
    %121 = vmatprep.subr.mxu0 0.0
    %122 = vmatpush1.msra.mxu0 0.0
    %123 = vmatprep.subr.mxu0 0.0
    %124 = vmatpush1.msra.mxu0 0.0
    %125 = vmatprep.subr.mxu0 0.0
    %126 = vmatpush1.msra.mxu0 0.0
    %127 = vmatprep.subr.mxu0 0.0
    %128 = vmatpush1.msra.mxu0 0.0
    %129 = vmatprep.subr.mxu0 0.0
    %130 = vmatpush1.msra.mxu0 0.0
    %131 = vmatprep.subr.mxu0 0.0
    %132 = vmatpush1.msra.mxu0 0.0
    %133 = vmatprep.subr.mxu0 0.0
    %134 = vmatpush1.msra.mxu0 0.0
    %135 = vmatprep.subr.mxu0 0.0
    %136 = vmatpush1.msra.mxu0 0.0
    %137 = vmatprep.mubr.f32.mxu0 0.0
    %138 = vmatmul.mubr.f32.gmra.mrb[0].mxu0 %v58
    %v139 = vpop.f32.mrb[0].mxu0
    %v140 = vadd.f32 %v54, %v139
    %v141 = vpop.f32.mrb[0].mxu0
    %v142 = vadd.f32 %v54, %v141
    %143 = vdwg.mxu0
    %144 = vmatprep.subr.mxu0 %v33
    %145 = vmatpush1.msra.mxu0 %v32
    %146 = vmatprep.subr.mxu0 %v37
    %147 = vmatpush1.msra.mxu0 %v36
    %148 = vmatprep.subr.mxu0 %v41
    %149 = vmatpush1.msra.mxu0 %v40
    %150 = vmatprep.subr.mxu0 %v45
    %151 = vmatpush1.msra.mxu0 %v44
    %152 = vmatprep.subr.mxu0 %v71
    %153 = vmatpush1.msra.mxu0 %v68
    %154 = vmatprep.subr.mxu0 0.0
    %155 = vmatpush1.msra.mxu0 0.0
    %156 = vmatprep.subr.mxu0 0.0
    %157 = vmatpush1.msra.mxu0 0.0
    %158 = vmatprep.subr.mxu0 0.0
    %159 = vmatpush1.msra.mxu0 0.0
    %160 = vmatprep.subr.mxu0 0.0
    %161 = vmatpush1.msra.mxu0 0.0
    %162 = vmatprep.subr.mxu0 0.0
    %163 = vmatpush1.msra.mxu0 0.0
    %164 = vmatprep.subr.mxu0 0.0
    %165 = vmatpush1.msra.mxu0 0.0
    %166 = vmatprep.subr.mxu0 0.0
    %167 = vmatpush1.msra.mxu0 0.0
    %168 = vmatprep.subr.mxu0 0.0
    %169 = vmatpush1.msra.mxu0 0.0
    %170 = vmatprep.subr.mxu0 0.0
    %171 = vmatpush1.msra.mxu0 0.0
    %172 = vmatprep.subr.mxu0 0.0
    %173 = vmatpush1.msra.mxu0 0.0
    %174 = vmatprep.subr.mxu0 0.0
    %175 = vmatpush1.msra.mxu0 0.0
    %176 = vmatprep.subr.mxu0 0.0
    %177 = vmatpush1.msra.mxu0 0.0
    %178 = vmatprep.subr.mxu0 0.0
    %179 = vmatpush1.msra.mxu0 0.0
    %180 = vmatprep.subr.mxu0 0.0
    %181 = vmatpush1.msra.mxu0 0.0
    %182 = vmatprep.subr.mxu0 0.0
    %183 = vmatpush1.msra.mxu0 0.0
    %184 = vmatprep.subr.mxu0 0.0
    %185 = vmatpush1.msra.mxu0 0.0
    %186 = vmatprep.subr.mxu0 0.0
    %187 = vmatpush1.msra.mxu0 0.0
    %188 = vmatprep.subr.mxu0 0.0
    %189 = vmatpush1.msra.mxu0 0.0
    %190 = vmatprep.subr.mxu0 0.0
    %191 = vmatpush1.msra.mxu0 0.0
    %192 = vmatprep.subr.mxu0 0.0
    %193 = vmatpush1.msra.mxu0 0.0
    %194 = vmatprep.subr.mxu0 0.0
    %195 = vmatpush1.msra.mxu0 0.0
    %196 = vmatprep.subr.mxu0 0.0
    %197 = vmatpush1.msra.mxu0 0.0
    %198 = vmatprep.subr.mxu0 0.0
    %199 = vmatpush1.msra.mxu0 0.0
    %200 = vmatprep.subr.mxu0 0.0
    %201 = vmatpush1.msra.mxu0 0.0
    %202 = vmatprep.subr.mxu0 0.0
    %203 = vmatpush1.msra.mxu0 0.0
    %204 = vmatprep.subr.mxu0 0.0
    %205 = vmatpush1.msra.mxu0 0.0
    %206 = vmatprep.subr.mxu0 0.0
    %207 = vmatpush1.msra.mxu0 0.0
    %208 = vmatprep.mubr.f32.mxu0 0.0
    %209 = vmatmul.mubr.f32.gmra.mrb[0].mxu0 %v58
    %v210 = vpop.f32.mrb[0].mxu0
    %v211 = vadd.f32 %v54, %v210
    %v212 = vpop.f32.mrb[0].mxu0
    %v213 = vadd.f32 %v54, %v212
    %214 = vdwg.mxu0
    %vm215 = vcmp.ge.f32.partialorder %v140, 0.0
    %vm216 = vcmp.ge.f32.partialorder %v142, 0.0
    %vm217 = vcmp.ge.f32.partialorder %v211, 0.0
    %vm218 = vcmp.ge.f32.partialorder %v213, 0.0
    %v219 = vmul.f32 %v140, 0.2
    %v220 = vmul.f32 %v142, 0.2
    %v221 = vmul.f32 %v211, 0.2
    %v222 = vmul.f32 %v213, 0.2
    %v223 = vsel %vm215, %v140, %v219
    %v224 = vsel %vm216, %v142, %v220
    %v225 = vsel %vm217, %v211, %v221
    %v226 = vsel %vm218, %v213, %v222
    %v227 = vmul.f32 %v223, 1.4142135
    %v228 = vmul.f32 %v224, 1.4142135
    %v229 = vmul.f32 %v225, 1.4142135
    %v230 = vmul.f32 %v226, 1.4142135
    %231 = vst [vmem:[#allocation5] sm:$0xff] %v227
    %232 = vst [vmem:[#allocation5 + $0x8] sm:$0xff] %v228
    %233 = vst [vmem:[#allocation5 + $0x10] sm:$0xff] %v229
    %234 = vst [vmem:[#allocation5 + $0x18] sm:$0xff] %v230
    // Predicated region
    $region18: #{tpu_custom_call.1} parent=1 // pred_check
      _
    $region19: #{tpu_custom_call.1} parent=1 // pred_check_branch
      %236 = sbr.rel (0) target = $region21
    $region20: #{tpu_custom_call.1} parent=1 // pred_region
      %s238 = ssub.s32 512, 512
      %239 = vsyncadd [#allocation4], %s238
      %s241 = sshll.u32 [#allocation5], 4
      %s242 = int_to_ptr.vmem [resolvable:$true] %s241
      %244 = dma.vmem_to_hbm [thread:$0]  %s242, 512, %s3, [#allocation4]
    $region21: #{tpu_custom_call.1} parent=1 // pred_fallthru
      _
    // Predicated region
    $region22: #{tpu_custom_call.1} parent=1 // pred_check
      _
    $region23: #{tpu_custom_call.1} parent=1 // pred_check_branch
      %246 = sbr.rel (0) target = $region25
    $region24: #{tpu_custom_call.1} parent=1 // pred_region
      %247 = dma.done [#allocation4], 512
    $region25: #{tpu_custom_call.1} parent=1 // pred_fallthru
      _
    %248 = vsyncpa [#allocation3], 1
    %249 = vsyncpa [#allocation4], 1

</llo_original>
